<compile_context>
chip_gen: v5e
topology: v5e:2x2
jax: 0.10.0
libtpu: 0.0.40
codegen_flags: <defaults>
</compile_context>

<pallas_src>
import functools

import jax
import jax.numpy as jnp
from jax.experimental import pallas as pl
from jax.experimental.pallas import tpu as pltpu


def _round_up(x, m):
    return ((x + m - 1) // m) * m


def _cdiv(a, b):
    return (a + b - 1) // b


def _vmem_capacity_bytes():
    """Physical VMEM per TensorCore; conservative (v7x) fallback."""
    try:
        return int(pltpu.get_tpu_info().vmem_capacity_bytes)
    except Exception:
        return 64 * 1024 * 1024


def _pick_chunk(d):
    """Chunk width along each head's hidden axis (bounds live f32 activations)."""
    for c in (512, 256, 128):
        if d > c and d % c == 0:
            return c
    return d


def _heads_kernel(x_ref,
                  w1_ref, b1_ref,
                  w2i_ref, b2i_ref,
                  w2c_ref, b2c_ref,
                  out_emb_ref, logits_ref, *, chunk, n_half):
    """Fused dual-head MLP with hidden-axis chunking.

    Layer-1 weights of both heads are fused as [D, 2D]; the loop walks the
    fused hidden axis in `chunk`-wide column blocks (first n_half chunks feed
    the instance head, the rest the cluster head), so only a [tB, chunk] f32
    hidden tile is live at a time and the layer-2 results accumulate into
    small f32 y_i / y_c tiles.  Output stores are unmasked full-lane stores
    because Ep/Kp are 128-padded.
    """
    x = x_ref[...]                                  # [tB, D]
    tB = x.shape[0]
    D = w2i_ref.shape[0]
    Ep = w2i_ref.shape[1]
    Kp = w2c_ref.shape[1]

    y_i = jnp.zeros((tB, Ep), jnp.float32)
    y_c = jnp.zeros((tB, Kp), jnp.float32)

    for j in range(2 * n_half):                     # static, unrolled
        c0 = j * chunk
        h = jnp.dot(x, w1_ref[:, c0:c0 + chunk],
                    preferred_element_type=jnp.float32)
        h = jnp.maximum(h + b1_ref[:, c0:c0 + chunk], 0.0)
        if j < n_half:                              # instance-head half
            h = h.astype(w2i_ref.dtype)
            y_i = y_i + jnp.dot(h, w2i_ref[c0:c0 + chunk, :],
                                preferred_element_type=jnp.float32)
        else:                                       # cluster-head half
            r0 = c0 - D
            h = h.astype(w2c_ref.dtype)
            y_c = y_c + jnp.dot(h, w2c_ref[r0:r0 + chunk, :],
                                preferred_element_type=jnp.float32)

    out_emb_ref[...] = (y_i + b2i_ref[...]).astype(out_emb_ref.dtype)
    logits_ref[...] = (y_c + b2c_ref[...]).astype(logits_ref.dtype)


def pack_params(params, *, weight_dtype=None):
    """One-time packing of the two Head Linear params into kernel layout.

    * Layer-1 weights/biases of both heads fused to [D, 2D] / [1, 2D].
    * Layer-2 weights/biases zero-padded to 128-lane multiples (padded output
      columns are exact zeros, sliced off by the wrapper).
    * Optionally cast to bf16 (weight_dtype=jnp.bfloat16) for the fast MXU
      path; the kernel accumulates in f32 either way.

    Call ONCE at init (not per forward) — avoids re-materializing multi-MiB
    packed weights in HBM on every call.  Returns (packed_dict, (E, K)).
    """
    e = params["w2i"].shape[1]
    k = params["w2c"].shape[1]
    ep = _round_up(e, 128)
    kp = _round_up(k, 128)

    w1 = jnp.concatenate([params["w1i"], params["w1c"]], axis=1)     # [D, 2D]
    b1 = jnp.concatenate([params["b1i"], params["b1c"]], axis=1)     # [1, 2D]
    w2i = jnp.pad(params["w2i"], ((0, 0), (0, ep - e)))              # [D, Ep]
    b2i = jnp.pad(params["b2i"], ((0, 0), (0, ep - e)))              # [1, Ep]
    w2c = jnp.pad(params["w2c"], ((0, 0), (0, kp - k)))              # [D, Kp]
    b2c = jnp.pad(params["b2c"], ((0, 0), (0, kp - k)))              # [1, Kp]

    packed = dict(w1=w1, b1=b1, w2i=w2i, b2i=b2i, w2c=w2c, b2c=b2c)
    if weight_dtype is not None:
        packed = {n: v.astype(weight_dtype) for n, v in packed.items()}
    return packed, (e, k)


@functools.partial(jax.jit,
                   static_argnames=("out_dims", "block_b", "vmem_limit_bytes",
                                    "return_padded"))
def contrastive_clustering_forward(in_emb, packed, *, out_dims, block_b=None,
                                   vmem_limit_bytes=None, return_padded=False):
    """Returns (in_emb, out_emb, logits) — same tuple as main_forward().

    `packed` comes from pack_params() (done once at init); `out_dims` is the
    static (embeddings_dimension, num_clusters) pair.  With return_padded=True
    the 128-lane-padded / batch-padded kernel outputs are returned directly
    (no post-kernel HBM slice pass).
    """
    B, D = in_emb.shape
    E, K = out_dims
    w1, b1 = packed["w1"], packed["b1"]
    w2i, b2i = packed["w2i"], packed["b2i"]
    w2c, b2c = packed["w2c"], packed["b2c"]
    Ep, Kp = w2i.shape[1], w2c.shape[1]
    out_dtype = in_emb.dtype

    # Sublane multiple depends on activation dtype (8 f32, 16 bf16, 32 int8).
    x_itemsize = jnp.dtype(in_emb.dtype).itemsize
    sub = max(8, 32 // x_itemsize)

    # Batch tile: single tile for small batches; for B >= 128 guarantee >= 2
    # grid steps so ("parallel",) can use both v7x TensorCores; cap at 512 rows
    # (weights are resident, big tiles just amortize per-step overhead).
    if block_b is None:
        b_aligned = _round_up(B, sub)
        if b_aligned <= 128:
            block_b = b_aligned
        else:
            block_b = min(512, _round_up(_cdiv(b_aligned, 2), sub))
    block_b = _round_up(block_b, sub)

    B_pad = _round_up(B, block_b)
    x = in_emb if B_pad == B else jnp.pad(in_emb, ((0, B_pad - B), (0, 0)))

    chunk = _pick_chunk(D)
    n_half = D // chunk
    kernel = functools.partial(_heads_kernel, chunk=chunk, n_half=n_half)

    # Single-buffered resident weights: whole array placed in VMEM once,
    # no per-step pipeline DMA and no double-buffer allocation.
    def resident():
        return pl.BlockSpec(memory_space=pltpu.MemorySpace.VMEM)

    # Auto VMEM budget from the actual buffer sizes (weights x1, x/out tiles
    # x2 for double buffering, f32 chunk + accumulator scratch), capped per
    # generation via the queried physical VMEM (64 MiB fallback => v7x-safe).
    w_itemsize = jnp.dtype(w1.dtype).itemsize
    o_itemsize = jnp.dtype(out_dtype).itemsize
    weight_bytes = (w1.size + b1.size + w2i.size + b2i.size
                    + w2c.size + b2c.size) * w_itemsize
    tile_bytes = (block_b * D * x_itemsize
                  + block_b * (Ep + Kp) * o_itemsize) * 2
    scratch_bytes = block_b * (chunk + Ep + Kp) * 4
    if vmem_limit_bytes is None:
        need = weight_bytes + tile_bytes + scratch_bytes
        vmem_limit_bytes = max(need + need // 3 + (4 << 20), 32 << 20)
        vmem_limit_bytes = min(vmem_limit_bytes,
                               (_vmem_capacity_bytes() * 7) // 8)

    flops = 2 * B_pad * D * (2 * D + Ep + Kp)
    bytes_accessed = (B_pad * D * x_itemsize + weight_bytes
                      + B_pad * (Ep + Kp) * o_itemsize)

    out_emb_p, logits_p = pl.pallas_call(
        kernel,
        out_shape=(
            jax.ShapeDtypeStruct((B_pad, Ep), out_dtype),
            jax.ShapeDtypeStruct((B_pad, Kp), out_dtype),
        ),
        grid_spec=pltpu.PrefetchScalarGridSpec(
            num_scalar_prefetch=0,
            grid=(B_pad // block_b,),
            in_specs=[
                pl.BlockSpec((block_b, D), lambda i: (i, 0)),   # x tile (pipelined)
                resident(), resident(),                         # fused layer 1
                resident(), resident(),                         # inst layer 2
                resident(), resident(),                         # clust layer 2
            ],
            out_specs=[
                pl.BlockSpec((block_b, Ep), lambda i: (i, 0)),
                pl.BlockSpec((block_b, Kp), lambda i: (i, 0)),
            ],
        ),
        compiler_params=pltpu.CompilerParams(
            dimension_semantics=("parallel",),
            vmem_limit_bytes=int(vmem_limit_bytes),
        ),
        cost_estimate=pl.CostEstimate(flops=int(flops), transcendentals=0,
                                      bytes_accessed=int(bytes_accessed)),
    )(x, w1, b1, w2i, b2i, w2c, b2c)

    if return_padded:
        return in_emb, out_emb_p, logits_p
    out_emb = out_emb_p if (B_pad == B and Ep == E) else out_emb_p[:B, :E]
    logits = logits_p if (B_pad == B and Kp == K) else logits_p[:B, :K]
    return in_emb, out_emb, logits


def init_params(key, backbone_dim, embeddings_dim, num_clusters):
    """Deterministic PyTorch-Linear-style init: U(-1/sqrt(fan_in), 1/sqrt(fan_in)).

    Weights stored as [in_dim, out_dim] (transposed vs. torch) so the kernel
    computes x @ W; biases stored as [1, out_dim].
    """
    def linear(k, fan_in, fan_out):
        kw, kb = jax.random.split(k)
        bound = 1.0 / jnp.sqrt(fan_in)
        w = jax.random.uniform(kw, (fan_in, fan_out), jnp.float32, -bound, bound)
        b = jax.random.uniform(kb, (1, fan_out), jnp.float32, -bound, bound)
        return w, b

    k1, k2, k3, k4 = jax.random.split(key, 4)
    w1i, b1i = linear(k1, backbone_dim, backbone_dim)
    w2i, b2i = linear(k2, backbone_dim, embeddings_dim)
    w1c, b1c = linear(k3, backbone_dim, backbone_dim)
    w2c, b2c = linear(k4, backbone_dim, num_clusters)
    return dict(w1i=w1i, b1i=b1i, w2i=w2i, b2i=b2i,
                w1c=w1c, b1c=b1c, w2c=w2c, b2c=b2c)


def _reference(in_emb, p):
    h_i = jnp.maximum(in_emb @ p["w1i"] + p["b1i"], 0.0)
    out_emb = h_i @ p["w2i"] + p["b2i"]
    h_c = jnp.maximum(in_emb @ p["w1c"] + p["b1c"], 0.0)
    logits = h_c @ p["w2c"] + p["b2c"]
    return out_emb, logits


if __name__ == "__main__":
    # Small shapes consistent with the module: backbone (CLIP) embedding dim,
    # projection embedding dim, number of clusters.
    B = 8                 # batch
    D = 128               # backbone (main) embeddings dimension
    E = 64                # embeddings_dimension (inst head output)
    K = 16                # num_clusters (clust head output)

    key = jax.random.PRNGKey(0)
    k_params, k_x = jax.random.split(key)
    raw = init_params(k_params, D, E, K)
    packed, out_dims = pack_params(raw)          # one-time packing at init
    in_emb = jax.random.normal(k_x, (B, D), jnp.float32)

    in_out, out_emb, logits = contrastive_clustering_forward(
        in_emb, packed, out_dims=out_dims)
    jax.block_until_ready((in_out, out_emb, logits))

    ref_out_emb, ref_logits = _reference(in_emb, raw)
    assert out_emb.shape == (B, E) and logits.shape == (B, K)
    assert jnp.allclose(out_emb, ref_out_emb, atol=1e-4, rtol=1e-4)
    assert jnp.allclose(logits, ref_logits, atol=1e-4, rtol=1e-4)
    assert jnp.array_equal(in_out, in_emb)

    # Ragged / larger batch: exercises the padded, >=2-step "parallel" grid.
    B2 = 300
    in_emb2 = jax.random.normal(jax.random.PRNGKey(1), (B2, D), jnp.float32)
    _, out_emb2, logits2 = contrastive_clustering_forward(
        in_emb2, packed, out_dims=out_dims)
    jax.block_until_ready((out_emb2, logits2))
    ref_out2, ref_log2 = _reference(in_emb2, raw)
    assert out_emb2.shape == (B2, E) and logits2.shape == (B2, K)
    assert jnp.allclose(out_emb2, ref_out2, atol=1e-4, rtol=1e-4)
    assert jnp.allclose(logits2, ref_log2, atol=1e-4, rtol=1e-4)

    # bf16 weight/activation path (half weight DMA, native MXU); f32 accum.
    packed_bf16, _ = pack_params(raw, weight_dtype=jnp.bfloat16)
    _, out_emb3, logits3 = contrastive_clustering_forward(
        in_emb.astype(jnp.bfloat16), packed_bf16, out_dims=out_dims)
    jax.block_until_ready((out_emb3, logits3))
    assert out_emb3.shape == (B, E) and logits3.shape == (B, K)
    assert jnp.allclose(out_emb3.astype(jnp.float32), ref_out_emb,
                        atol=6e-2, rtol=6e-2)
    assert jnp.allclose(logits3.astype(jnp.float32), ref_logits,
                        atol=6e-2, rtol=6e-2)

    print("KERNEL_OK")
</pallas_src>

<mosaic_0001>
module attributes {stable_mosaic.version = 11 : i64} {
  func.func @_heads_kernel(%arg0: i32, %arg1: memref<8x128xf32, #tpu.memory_space<vmem>>, %arg2: memref<128x256xf32, #tpu.memory_space<vmem>>, %arg3: memref<1x256xf32, #tpu.memory_space<vmem>>, %arg4: memref<128x128xf32, #tpu.memory_space<vmem>>, %arg5: memref<1x128xf32, #tpu.memory_space<vmem>>, %arg6: memref<128x128xf32, #tpu.memory_space<vmem>>, %arg7: memref<1x128xf32, #tpu.memory_space<vmem>>, %arg8: memref<8x128xf32, #tpu.memory_space<vmem>>, %arg9: memref<8x128xf32, #tpu.memory_space<vmem>>) attributes {dimension_semantics = [#tpu.dimension_semantics<parallel>], iteration_bounds = array<i64: 1>, scalar_prefetch = 0 : i64, scratch_operands = 0 : i64, tpu.core_type = #tpu.core_type<tc>, window_params = [{transform_indices = @transform_0, window_bounds = array<i64: 8, 128>}, {pipeline_mode = #tpu.pipeline_mode<synchronous>, transform_indices = @transform_1, window_bounds = array<i64: 128, 256>}, {pipeline_mode = #tpu.pipeline_mode<synchronous>, transform_indices = @transform_2, window_bounds = array<i64: 1, 256>}, {pipeline_mode = #tpu.pipeline_mode<synchronous>, transform_indices = @transform_3, window_bounds = array<i64: 128, 128>}, {pipeline_mode = #tpu.pipeline_mode<synchronous>, transform_indices = @transform_4, window_bounds = array<i64: 1, 128>}, {pipeline_mode = #tpu.pipeline_mode<synchronous>, transform_indices = @transform_5, window_bounds = array<i64: 128, 128>}, {pipeline_mode = #tpu.pipeline_mode<synchronous>, transform_indices = @transform_6, window_bounds = array<i64: 1, 128>}, {transform_indices = @transform_7, window_bounds = array<i64: 8, 128>}, {transform_indices = @transform_8, window_bounds = array<i64: 8, 128>}]} {
    %c0 = arith.constant 0 : index
    %c0_0 = arith.constant 0 : index
    %0 = vector.load %arg1[%c0, %c0_0] : memref<8x128xf32, #tpu.memory_space<vmem>>, vector<8x128xf32>
    %cst = arith.constant 0.000000e+00 : f32
    %1 = vector.broadcast %cst : f32 to vector<8x128xf32>
    %cst_1 = arith.constant 0.000000e+00 : f32
    %2 = vector.broadcast %cst_1 : f32 to vector<8x128xf32>
    %c0_2 = arith.constant 0 : index
    %c0_3 = arith.constant 0 : index
    %3 = vector.load %arg2[%c0_2, %c0_3] : memref<128x256xf32, #tpu.memory_space<vmem>>, vector<128x128xf32>
    %cst_4 = arith.constant dense<0.000000e+00> : vector<8x128xf32>
    %4 = tpu.matmul %0, %3, %cst_4 {dimension_numbers = #tpu.dot_dimension_numbers<[1], [0], [0], [1], [0, 0, 1, 1], [], []>} : vector<8x128xf32>, vector<128x128xf32>, vector<8x128xf32> -> vector<8x128xf32>
    %c0_5 = arith.constant 0 : index
    %c0_6 = arith.constant 0 : index
    %5 = vector.load %arg3[%c0_5, %c0_6] : memref<1x256xf32, #tpu.memory_space<vmem>>, vector<1x128xf32>
    %6 = vector.broadcast %5 : vector<1x128xf32> to vector<8x128xf32>
    %7 = arith.addf %4, %6 : vector<8x128xf32>
    %cst_7 = arith.constant 0.000000e+00 : f32
    %8 = vector.broadcast %cst_7 : f32 to vector<8x128xf32>
    %9 = arith.maximumf %7, %8 : vector<8x128xf32>
    %c0_8 = arith.constant 0 : index
    %c0_9 = arith.constant 0 : index
    %10 = vector.load %arg4[%c0_8, %c0_9] : memref<128x128xf32, #tpu.memory_space<vmem>>, vector<128x128xf32>
    %cst_10 = arith.constant dense<0.000000e+00> : vector<8x128xf32>
    %11 = tpu.matmul %9, %10, %cst_10 {dimension_numbers = #tpu.dot_dimension_numbers<[1], [0], [0], [1], [0, 0, 1, 1], [], []>} : vector<8x128xf32>, vector<128x128xf32>, vector<8x128xf32> -> vector<8x128xf32>
    %12 = arith.addf %1, %11 : vector<8x128xf32>
    %c0_11 = arith.constant 0 : index
    %c128 = arith.constant 128 : index
    %13 = vector.load %arg2[%c0_11, %c128] : memref<128x256xf32, #tpu.memory_space<vmem>>, vector<128x128xf32>
    %cst_12 = arith.constant dense<0.000000e+00> : vector<8x128xf32>
    %14 = tpu.matmul %0, %13, %cst_12 {dimension_numbers = #tpu.dot_dimension_numbers<[1], [0], [0], [1], [0, 0, 1, 1], [], []>} : vector<8x128xf32>, vector<128x128xf32>, vector<8x128xf32> -> vector<8x128xf32>
    %c0_13 = arith.constant 0 : index
    %c128_14 = arith.constant 128 : index
    %15 = vector.load %arg3[%c0_13, %c128_14] : memref<1x256xf32, #tpu.memory_space<vmem>>, vector<1x128xf32>
    %16 = vector.broadcast %15 : vector<1x128xf32> to vector<8x128xf32>
    %17 = arith.addf %14, %16 : vector<8x128xf32>
    %cst_15 = arith.constant 0.000000e+00 : f32
    %18 = vector.broadcast %cst_15 : f32 to vector<8x128xf32>
    %19 = arith.maximumf %17, %18 : vector<8x128xf32>
    %c0_16 = arith.constant 0 : index
    %c0_17 = arith.constant 0 : index
    %20 = vector.load %arg6[%c0_16, %c0_17] : memref<128x128xf32, #tpu.memory_space<vmem>>, vector<128x128xf32>
    %cst_18 = arith.constant dense<0.000000e+00> : vector<8x128xf32>
    %21 = tpu.matmul %19, %20, %cst_18 {dimension_numbers = #tpu.dot_dimension_numbers<[1], [0], [0], [1], [0, 0, 1, 1], [], []>} : vector<8x128xf32>, vector<128x128xf32>, vector<8x128xf32> -> vector<8x128xf32>
    %22 = arith.addf %2, %21 : vector<8x128xf32>
    %c0_19 = arith.constant 0 : index
    %c0_20 = arith.constant 0 : index
    %23 = vector.load %arg5[%c0_19, %c0_20] : memref<1x128xf32, #tpu.memory_space<vmem>>, vector<1x128xf32>
    %24 = vector.broadcast %23 : vector<1x128xf32> to vector<8x128xf32>
    %25 = arith.addf %12, %24 : vector<8x128xf32>
    %c0_21 = arith.constant 0 : index
    %c0_22 = arith.constant 0 : index
    %26 = vector.load %arg8[%c0_21, %c0_22] : memref<8x128xf32, #tpu.memory_space<vmem>>, vector<8x128xf32>
    tpu.vector_store %arg8[%c0_21, %c0_22], %25 {strides = array<i32>} : memref<8x128xf32, #tpu.memory_space<vmem>>, vector<8x128xf32>,
    %c0_23 = arith.constant 0 : index
    %c0_24 = arith.constant 0 : index
    %27 = vector.load %arg7[%c0_23, %c0_24] : memref<1x128xf32, #tpu.memory_space<vmem>>, vector<1x128xf32>
    %28 = vector.broadcast %27 : vector<1x128xf32> to vector<8x128xf32>
    %29 = arith.addf %22, %28 : vector<8x128xf32>
    %c0_25 = arith.constant 0 : index
    %c0_26 = arith.constant 0 : index
    %30 = vector.load %arg9[%c0_25, %c0_26] : memref<8x128xf32, #tpu.memory_space<vmem>>, vector<8x128xf32>
    tpu.vector_store %arg9[%c0_25, %c0_26], %29 {strides = array<i32>} : memref<8x128xf32, #tpu.memory_space<vmem>>, vector<8x128xf32>,
    return
  }
  func.func @transform_0(%arg0: i32) -> (i32, i32) {
    %c0_i32 = arith.constant 0 : i32
    %c0_i32_0 = arith.constant 0 : i32
    return %arg0, %c0_i32 : i32, i32
  }
  func.func @transform_1(%arg0: i32) -> (i32, i32) {
    %c0_i32 = arith.constant 0 : i32
    %c0_i32_0 = arith.constant 0 : i32
    %c0_i32_1 = arith.constant 0 : i32
    return %c0_i32, %c0_i32_0 : i32, i32
  }
  func.func @transform_2(%arg0: i32) -> (i32, i32) {
    %c0_i32 = arith.constant 0 : i32
    %c0_i32_0 = arith.constant 0 : i32
    %c0_i32_1 = arith.constant 0 : i32
    return %c0_i32, %c0_i32_0 : i32, i32
  }
  func.func @transform_3(%arg0: i32) -> (i32, i32) {
    %c0_i32 = arith.constant 0 : i32
    %c0_i32_0 = arith.constant 0 : i32
    %c0_i32_1 = arith.constant 0 : i32
    return %c0_i32, %c0_i32_0 : i32, i32
  }
  func.func @transform_4(%arg0: i32) -> (i32, i32) {
    %c0_i32 = arith.constant 0 : i32
    %c0_i32_0 = arith.constant 0 : i32
    %c0_i32_1 = arith.constant 0 : i32
    return %c0_i32, %c0_i32_0 : i32, i32
  }
  func.func @transform_5(%arg0: i32) -> (i32, i32) {
    %c0_i32 = arith.constant 0 : i32
    %c0_i32_0 = arith.constant 0 : i32
    %c0_i32_1 = arith.constant 0 : i32
    return %c0_i32, %c0_i32_0 : i32, i32
  }
  func.func @transform_6(%arg0: i32) -> (i32, i32) {
    %c0_i32 = arith.constant 0 : i32
    %c0_i32_0 = arith.constant 0 : i32
    %c0_i32_1 = arith.constant 0 : i32
    return %c0_i32, %c0_i32_0 : i32, i32
  }
  func.func @transform_7(%arg0: i32) -> (i32, i32) {
    %c0_i32 = arith.constant 0 : i32
    %c0_i32_0 = arith.constant 0 : i32
    return %arg0, %c0_i32 : i32, i32
  }
  func.func @transform_8(%arg0: i32) -> (i32, i32) {
    %c0_i32 = arith.constant 0 : i32
    %c0_i32_0 = arith.constant 0 : i32
    return %arg0, %c0_i32 : i32, i32
  }
}

</mosaic_0001>

<llo_original>
// kernel: contrastive_clustering_forward.1
$region0: #{contrastive_clustering_forward.1}
  #allocation0 [shape = 'u32[]', space=smem, size = 0x4, offset = 0x4, fixed_abs, tag = 'smem constant byte address 0x4 - core index']
  #allocation1 [shape = 'u32[72,128]{1,0:T(1,128)}', space=vmem, size = 0x9000, scoped, tag = 'internal scratch']
  %s0 = inlined_call_operand.hbm [shape: f32[8,128], index: 0, kind: input, shape index: {}]
  %s1 = inlined_call_operand.hbm [shape: f32[128,256], index: 1, kind: input, shape index: {}]
  %s2 = inlined_call_operand.hbm [shape: f32[1,256], index: 2, kind: input, shape index: {}]
  %s3 = inlined_call_operand.hbm [shape: f32[128,128], index: 3, kind: input, shape index: {}]
  %s4 = inlined_call_operand.vmem [shape: f32[1,128], index: 4, kind: input, shape index: {}]
  %s5 = inlined_call_operand.hbm [shape: f32[128,128], index: 5, kind: input, shape index: {}]
  %s6 = inlined_call_operand.hbm [shape: f32[1,128], index: 6, kind: input, shape index: {}]
  %s7 = inlined_call_operand.hbm [shape: f32[8,128], index: 7, kind: output, shape index: {0}]
  %s8 = inlined_call_operand.hbm [shape: f32[8,128], index: 8, kind: output, shape index: {1}]
  %9 = xla_tuple %s7, %s8
  %s10 = sld [smem:[#allocation0]]
  $region70: #{contrastive_clustering_forward.1} parent=0
    _
  %s12 = ssub.s32 1, %s10
  %s13 = scalar_select 0, %s12, %s10
  $region1: #{contrastive_clustering_forward.1} parent=0
    #allocation2 [shape = 'u8[4096]{0}', space=vmem, size = 0x1000, scoped, tag = 'input window, operand 0, single buffered']
    #allocation3 [shape = 's32[1]{0}', space=sflag, size = 0x4, scoped, tag = 'scoped memory for contrastive_clustering_forward.1']
    #allocation4 [shape = 's32[1]{0}', space=sflag, size = 0x4, scoped, tag = 'scoped memory for contrastive_clustering_forward.1']
    #allocation5 [shape = 'u8[131072]{0}', space=vmem, size = 0x20000, scoped, tag = 'input window, operand 1, single buffered']
    #allocation6 [shape = 's32[1]{0}', space=sflag, size = 0x4, scoped, tag = 'scoped memory for contrastive_clustering_forward.1']
    #allocation7 [shape = 'u8[1024]{0}', space=vmem, size = 0x400, scoped, tag = 'input window, operand 2, single buffered']
    #allocation8 [shape = 'u8[65536]{0}', space=vmem, size = 0x10000, scoped, tag = 'input window, operand 3, single buffered']
    #allocation9 [shape = 's32[1]{0}', space=sflag, size = 0x4, scoped, tag = 'scoped memory for contrastive_clustering_forward.1']
    #allocation10 [shape = 'u8[65536]{0}', space=vmem, size = 0x10000, scoped, tag = 'input window, operand 5, single buffered']
    #allocation11 [shape = 'u8[512]{0}', space=vmem, size = 0x400, scoped, tag = 'input window, operand 6, single buffered']
    #allocation12 [shape = 's32[1]{0}', space=sflag, size = 0x4, scoped, tag = 'scoped memory for contrastive_clustering_forward.1']
    #allocation13 [shape = 'u8[4096]{0}', space=vmem, size = 0x1000, scoped, tag = 'output window, operand 0, single buffered']
    #allocation14 [shape = 'u8[4096]{0}', space=vmem, size = 0x1000, scoped, tag = 'output window, operand 1, single buffered']
    #allocation15 [shape = 's32[1]{0}', space=sflag, size = 0x4, scoped, tag = 'scoped memory for contrastive_clustering_forward.1']
    %14 = vsyncpa [#allocation3], 0
    %15 = vsyncpa [#allocation6], 0
    %16 = vsyncpa [#allocation9], 0
    %17 = vsyncpa [#allocation12], 0
    %18 = vsyncpa [#allocation4], 0
    %19 = vsyncpa [#allocation15], 0
    // Predicated region
    $region2: #{contrastive_clustering_forward.1} parent=1 // pred_check
      _
    $region3: #{contrastive_clustering_forward.1} parent=1 // pred_check_branch
      %21 = sbr.rel (0) target = $region5
    $region4: #{contrastive_clustering_forward.1} parent=1 // pred_region
      %23 = vsyncadd [#allocation3], 0
      %s25 = sshll.u32 %s0, 4
      %s26 = int_to_ptr.hbm [resolvable:$true] %s25
      %s27 = sshll.u32 [#allocation2], 4
      %s28 = int_to_ptr.vmem [resolvable:$true] %s27
      %30 = dma.hbm_to_vmem [thread:$0]  %s26, 128, %s28, [#allocation3]
    $region5: #{contrastive_clustering_forward.1} parent=1 // pred_fallthru
      _
    // Predicated region
    $region6: #{contrastive_clustering_forward.1} parent=1 // pred_check
      _
    $region7: #{contrastive_clustering_forward.1} parent=1 // pred_check_branch
      %32 = sbr.rel (0) target = $region9
    $region8: #{contrastive_clustering_forward.1} parent=1 // pred_region
      %34 = vsyncadd [#allocation6], 0
      %s35 = sshll.u32 %s1, 4
      %s36 = int_to_ptr.hbm [resolvable:$true] %s35
      %s37 = sshll.u32 [#allocation5], 4
      %s38 = int_to_ptr.vmem [resolvable:$true] %s37
      %43 = dma.hbm_to_vmem [thread:$0]  %s36, 4096, %s38, [#allocation6], 256, 256, 16
    $region9: #{contrastive_clustering_forward.1} parent=1 // pred_fallthru
      _
    // Predicated region
    $region10: #{contrastive_clustering_forward.1} parent=1 // pred_check
      _
    $region11: #{contrastive_clustering_forward.1} parent=1 // pred_check_branch
      %45 = sbr.rel (0) target = $region13
    $region12: #{contrastive_clustering_forward.1} parent=1 // pred_region
      %47 = vsyncadd [#allocation6], 0
      %s49 = sshll.u32 %s2, 4
      %s50 = int_to_ptr.hbm [resolvable:$true] %s49
      %s51 = sshll.u32 [#allocation7], 4
      %s52 = int_to_ptr.vmem [resolvable:$true] %s51
      %54 = dma.hbm_to_vmem [thread:$0]  %s50, 32, %s52, [#allocation6]
    $region13: #{contrastive_clustering_forward.1} parent=1 // pred_fallthru
      _
    // Predicated region
    $region14: #{contrastive_clustering_forward.1} parent=1 // pred_check
      _
    $region15: #{contrastive_clustering_forward.1} parent=1 // pred_check_branch
      %56 = sbr.rel (0) target = $region17
    $region16: #{contrastive_clustering_forward.1} parent=1 // pred_region
      %58 = vsyncadd [#allocation9], 0
      %s59 = sshll.u32 %s3, 4
      %s60 = int_to_ptr.hbm [resolvable:$true] %s59
      %s61 = sshll.u32 [#allocation8], 4
      %s62 = int_to_ptr.vmem [resolvable:$true] %s61
      %67 = dma.hbm_to_vmem [thread:$0]  %s60, 2048, %s62, [#allocation9], 128, 128, 8
    $region17: #{contrastive_clustering_forward.1} parent=1 // pred_fallthru
      _
    // Predicated region
    $region18: #{contrastive_clustering_forward.1} parent=1 // pred_check
      _
    $region19: #{contrastive_clustering_forward.1} parent=1 // pred_check_branch
      %69 = sbr.rel (0) target = $region21
    $region20: #{contrastive_clustering_forward.1} parent=1 // pred_region
      _
    $region21: #{contrastive_clustering_forward.1} parent=1 // pred_fallthru
      _
    // Predicated region
    $region22: #{contrastive_clustering_forward.1} parent=1 // pred_check
      _
    $region23: #{contrastive_clustering_forward.1} parent=1 // pred_check_branch
      %71 = sbr.rel (0) target = $region25
    $region24: #{contrastive_clustering_forward.1} parent=1 // pred_region
      %73 = vsyncadd [#allocation9], 0
      %s74 = sshll.u32 %s5, 4
      %s75 = int_to_ptr.hbm [resolvable:$true] %s74
      %s76 = sshll.u32 [#allocation10], 4
      %s77 = int_to_ptr.vmem [resolvable:$true] %s76
      %82 = dma.hbm_to_vmem [thread:$0]  %s75, 2048, %s77, [#allocation9], 128, 128, 8
    $region25: #{contrastive_clustering_forward.1} parent=1 // pred_fallthru
      _
    // Predicated region
    $region26: #{contrastive_clustering_forward.1} parent=1 // pred_check
      _
    $region27: #{contrastive_clustering_forward.1} parent=1 // pred_check_branch
      %84 = sbr.rel (0) target = $region29
    $region28: #{contrastive_clustering_forward.1} parent=1 // pred_region
      %86 = vsyncadd [#allocation12], 0
      %s88 = sshll.u32 %s6, 4
      %s89 = int_to_ptr.hbm [resolvable:$true] %s88
      %s90 = sshll.u32 [#allocation11], 4
      %s91 = int_to_ptr.vmem [resolvable:$true] %s90
      %93 = dma.hbm_to_vmem [thread:$0]  %s89, 16, %s91, [#allocation12]
    $region29: #{contrastive_clustering_forward.1} parent=1 // pred_fallthru
      _
    // Predicated region
    $region30: #{contrastive_clustering_forward.1} parent=1 // pred_check
      _
    $region31: #{contrastive_clustering_forward.1} parent=1 // pred_check_branch
      %95 = sbr.rel (0) target = $region33
    $region32: #{contrastive_clustering_forward.1} parent=1 // pred_region
      %97 = dma.done [#allocation3], 128
    $region33: #{contrastive_clustering_forward.1} parent=1 // pred_fallthru
      _
    // Predicated region
    $region34: #{contrastive_clustering_forward.1} parent=1 // pred_check
      _
    $region35: #{contrastive_clustering_forward.1} parent=1 // pred_check_branch
      %99 = sbr.rel (0) target = $region37
    $region36: #{contrastive_clustering_forward.1} parent=1 // pred_region
      %101 = dma.done [#allocation6], 4096
    $region37: #{contrastive_clustering_forward.1} parent=1 // pred_fallthru
      _
    // Predicated region
    $region38: #{contrastive_clustering_forward.1} parent=1 // pred_check
      _
    $region39: #{contrastive_clustering_forward.1} parent=1 // pred_check_branch
      %103 = sbr.rel (0) target = $region41
    $region40: #{contrastive_clustering_forward.1} parent=1 // pred_region
      %105 = dma.done [#allocation6], 32
    $region41: #{contrastive_clustering_forward.1} parent=1 // pred_fallthru
      _
    // Predicated region
    $region42: #{contrastive_clustering_forward.1} parent=1 // pred_check
      _
    $region43: #{contrastive_clustering_forward.1} parent=1 // pred_check_branch
      %107 = sbr.rel (0) target = $region45
    $region44: #{contrastive_clustering_forward.1} parent=1 // pred_region
      %109 = dma.done [#allocation9], 2048
    $region45: #{contrastive_clustering_forward.1} parent=1 // pred_fallthru
      _
    // Predicated region
    $region46: #{contrastive_clustering_forward.1} parent=1 // pred_check
      _
    $region47: #{contrastive_clustering_forward.1} parent=1 // pred_check_branch
      %111 = sbr.rel (0) target = $region49
    $region48: #{contrastive_clustering_forward.1} parent=1 // pred_region
      %113 = dma.done [#allocation9], 2048
    $region49: #{contrastive_clustering_forward.1} parent=1 // pred_fallthru
      _
    // Predicated region
    $region50: #{contrastive_clustering_forward.1} parent=1 // pred_check
      _
    $region51: #{contrastive_clustering_forward.1} parent=1 // pred_check_branch
      %115 = sbr.rel (0) target = $region53
    $region52: #{contrastive_clustering_forward.1} parent=1 // pred_region
      %117 = dma.done [#allocation12], 16
    $region53: #{contrastive_clustering_forward.1} parent=1 // pred_fallthru
      _
    %v118 = vld [vmem:[#allocation2] sm:$0xff]
    %v119 = vld [vmem:[#allocation5] sm:$0xff]
    %v120 = vld [vmem:[#allocation5 + $0x10] sm:$0xff]
    %v121 = vld [vmem:[#allocation5 + $0x20] sm:$0xff]
    %v122 = vld [vmem:[#allocation5 + $0x30] sm:$0xff]
    %v123 = vld [vmem:[#allocation5 + $0x40] sm:$0xff]
    %v124 = vld [vmem:[#allocation5 + $0x50] sm:$0xff]
    %v125 = vld [vmem:[#allocation5 + $0x60] sm:$0xff]
    %v126 = vld [vmem:[#allocation5 + $0x70] sm:$0xff]
    %v127 = vld [vmem:[#allocation5 + $0x80] sm:$0xff]
    %v128 = vld [vmem:[#allocation5 + $0x90] sm:$0xff]
    %v129 = vld [vmem:[#allocation5 + $0xa0] sm:$0xff]
    %v130 = vld [vmem:[#allocation5 + $0xb0] sm:$0xff]
    %v131 = vld [vmem:[#allocation5 + $0xc0] sm:$0xff]
    %v132 = vld [vmem:[#allocation5 + $0xd0] sm:$0xff]
    %v133 = vld [vmem:[#allocation5 + $0xe0] sm:$0xff]
    %v134 = vld [vmem:[#allocation5 + $0xf0] sm:$0xff]
    %v135 = vld [vmem:[#allocation7] sm:$0x1]
    %v137 = vperm.slane %v135, 0
    %139 = vmatpush.msra.mxu0 %v134
    %140 = vmatpush.msra.mxu0 %v133
    %141 = vmatpush.msra.mxu0 %v132
    %142 = vmatpush.msra.mxu0 %v131
    %143 = vmatpush.msra.mxu0 %v130
    %144 = vmatpush.msra.mxu0 %v129
    %145 = vmatpush.msra.mxu0 %v128
    %146 = vmatpush.msra.mxu0 %v127
    %147 = vmatpush.msra.mxu0 %v126
    %148 = vmatpush.msra.mxu0 %v125
    %149 = vmatpush.msra.mxu0 %v124
    %150 = vmatpush.msra.mxu0 %v123
    %151 = vmatpush.msra.mxu0 %v122
    %152 = vmatpush.msra.mxu0 %v121
    %153 = vmatpush.msra.mxu0 %v120
    %154 = vmatpush.msra.mxu0 %v119
    %155 = vmatmul.f32.gmra.mxu0 %v118
    %v156 = vpop.f32.mrf.mxu0
    %v157 = vadd.f32 %v137, %v156
    %158 = vdwg.mxu0
    %v159 = vmax.f32 %v157, 0.0
    %v160 = vld [vmem:[#allocation8] sm:$0xff]
    %v161 = vld [vmem:[#allocation8 + $0x8] sm:$0xff]
    %v162 = vld [vmem:[#allocation8 + $0x10] sm:$0xff]
    %v163 = vld [vmem:[#allocation8 + $0x18] sm:$0xff]
    %v164 = vld [vmem:[#allocation8 + $0x20] sm:$0xff]
    %v165 = vld [vmem:[#allocation8 + $0x28] sm:$0xff]
    %v166 = vld [vmem:[#allocation8 + $0x30] sm:$0xff]
    %v167 = vld [vmem:[#allocation8 + $0x38] sm:$0xff]
    %v168 = vld [vmem:[#allocation8 + $0x40] sm:$0xff]
    %v169 = vld [vmem:[#allocation8 + $0x48] sm:$0xff]
    %v170 = vld [vmem:[#allocation8 + $0x50] sm:$0xff]
    %v171 = vld [vmem:[#allocation8 + $0x58] sm:$0xff]
    %v172 = vld [vmem:[#allocation8 + $0x60] sm:$0xff]
    %v173 = vld [vmem:[#allocation8 + $0x68] sm:$0xff]
    %v174 = vld [vmem:[#allocation8 + $0x70] sm:$0xff]
    %v175 = vld [vmem:[#allocation8 + $0x78] sm:$0xff]
    %v176 = vld [vmem:[#allocation5 + $0x8] sm:$0xff]
    %v177 = vld [vmem:[#allocation5 + $0x18] sm:$0xff]
    %v178 = vld [vmem:[#allocation5 + $0x28] sm:$0xff]
    %v179 = vld [vmem:[#allocation5 + $0x38] sm:$0xff]
    %v180 = vld [vmem:[#allocation5 + $0x48] sm:$0xff]
    %v181 = vld [vmem:[#allocation5 + $0x58] sm:$0xff]
    %v182 = vld [vmem:[#allocation5 + $0x68] sm:$0xff]
    %v183 = vld [vmem:[#allocation5 + $0x78] sm:$0xff]
    %v184 = vld [vmem:[#allocation5 + $0x88] sm:$0xff]
    %v185 = vld [vmem:[#allocation5 + $0x98] sm:$0xff]
    %v186 = vld [vmem:[#allocation5 + $0xa8] sm:$0xff]
    %v187 = vld [vmem:[#allocation5 + $0xb8] sm:$0xff]
    %v188 = vld [vmem:[#allocation5 + $0xc8] sm:$0xff]
    %v189 = vld [vmem:[#allocation5 + $0xd8] sm:$0xff]
    %v190 = vld [vmem:[#allocation5 + $0xe8] sm:$0xff]
    %v191 = vld [vmem:[#allocation5 + $0xf8] sm:$0xff]
    %v192 = vld [vmem:[#allocation7 + $0x1] sm:$0x1]
    %v194 = vperm.slane %v192, 0
    %196 = vmatpush.msra.mxu0 %v191
    %197 = vmatpush.msra.mxu0 %v190
    %198 = vmatpush.msra.mxu0 %v189
    %199 = vmatpush.msra.mxu0 %v188
    %200 = vmatpush.msra.mxu0 %v187
    %201 = vmatpush.msra.mxu0 %v186
    %202 = vmatpush.msra.mxu0 %v185
    %203 = vmatpush.msra.mxu0 %v184
    %204 = vmatpush.msra.mxu0 %v183
    %205 = vmatpush.msra.mxu0 %v182
    %206 = vmatpush.msra.mxu0 %v181
    %207 = vmatpush.msra.mxu0 %v180
    %208 = vmatpush.msra.mxu0 %v179
    %209 = vmatpush.msra.mxu0 %v178
    %210 = vmatpush.msra.mxu0 %v177
    %211 = vmatpush.msra.mxu0 %v176
    %212 = vmatmul.f32.gmra.mxu0 %v118
    %v213 = vpop.f32.mrf.mxu0
    %v214 = vadd.f32 %v194, %v213
    %215 = vdwg.mxu0
    %v216 = vmax.f32 %v214, 0.0
    %v217 = vld [vmem:[#allocation10] sm:$0xff]
    %v218 = vld [vmem:[#allocation10 + $0x8] sm:$0xff]
    %v219 = vld [vmem:[#allocation10 + $0x10] sm:$0xff]
    %v220 = vld [vmem:[#allocation10 + $0x18] sm:$0xff]
    %v221 = vld [vmem:[#allocation10 + $0x20] sm:$0xff]
    %v222 = vld [vmem:[#allocation10 + $0x28] sm:$0xff]
    %v223 = vld [vmem:[#allocation10 + $0x30] sm:$0xff]
    %v224 = vld [vmem:[#allocation10 + $0x38] sm:$0xff]
    %v225 = vld [vmem:[#allocation10 + $0x40] sm:$0xff]
    %v226 = vld [vmem:[#allocation10 + $0x48] sm:$0xff]
    %v227 = vld [vmem:[#allocation10 + $0x50] sm:$0xff]
    %v228 = vld [vmem:[#allocation10 + $0x58] sm:$0xff]
    %v229 = vld [vmem:[#allocation10 + $0x60] sm:$0xff]
    %v230 = vld [vmem:[#allocation10 + $0x68] sm:$0xff]
    %v231 = vld [vmem:[#allocation10 + $0x70] sm:$0xff]
    %v232 = vld [vmem:[#allocation10 + $0x78] sm:$0xff]
    %v233 = vld [vmem:[%s4] sm:$0x1]
    %v235 = vperm.slane %v233, 0
    %237 = vmatpush.msra.mxu0 %v175
    %238 = vmatpush.msra.mxu0 %v174
    %239 = vmatpush.msra.mxu0 %v173
    %240 = vmatpush.msra.mxu0 %v172
    %241 = vmatpush.msra.mxu0 %v171
    %242 = vmatpush.msra.mxu0 %v170
    %243 = vmatpush.msra.mxu0 %v169
    %244 = vmatpush.msra.mxu0 %v168
    %245 = vmatpush.msra.mxu0 %v167
    %246 = vmatpush.msra.mxu0 %v166
    %247 = vmatpush.msra.mxu0 %v165
    %248 = vmatpush.msra.mxu0 %v164
    %249 = vmatpush.msra.mxu0 %v163
    %250 = vmatpush.msra.mxu0 %v162
    %251 = vmatpush.msra.mxu0 %v161
    %252 = vmatpush.msra.mxu0 %v160
    %253 = vmatmul.f32.gmra.mxu0 %v159
    %v254 = vpop.f32.mrf.mxu0
    %v255 = vadd.f32 %v235, %v254
    %256 = vdwg.mxu0
    %257 = vst [vmem:[#allocation13] sm:$0xff] %v255
    %v258 = vld [vmem:[#allocation11] sm:$0x1]
    %v260 = vperm.slane %v258, 0
    %262 = vmatpush.msra.mxu0 %v232
    %263 = vmatpush.msra.mxu0 %v231
    %264 = vmatpush.msra.mxu0 %v230
    %265 = vmatpush.msra.mxu0 %v229
    %266 = vmatpush.msra.mxu0 %v228
    %267 = vmatpush.msra.mxu0 %v227
    %268 = vmatpush.msra.mxu0 %v226
    %269 = vmatpush.msra.mxu0 %v225
    %270 = vmatpush.msra.mxu0 %v224
    %271 = vmatpush.msra.mxu0 %v223
    %272 = vmatpush.msra.mxu0 %v222
    %273 = vmatpush.msra.mxu0 %v221
    %274 = vmatpush.msra.mxu0 %v220
    %275 = vmatpush.msra.mxu0 %v219
    %276 = vmatpush.msra.mxu0 %v218
    %277 = vmatpush.msra.mxu0 %v217
    %278 = vmatmul.f32.gmra.mxu0 %v216
    %v279 = vpop.f32.mrf.mxu0
    %v280 = vadd.f32 %v260, %v279
    %281 = vdwg.mxu0
    %282 = vst [vmem:[#allocation14] sm:$0xff] %v280
    // Predicated region
    $region54: #{contrastive_clustering_forward.1} parent=1 // pred_check
      _
    $region55: #{contrastive_clustering_forward.1} parent=1 // pred_check_branch
      %284 = sbr.rel (0) target = $region57
    $region56: #{contrastive_clustering_forward.1} parent=1 // pred_region
      %286 = vsyncadd [#allocation4], 0
      %s288 = sshll.u32 [#allocation13], 4
      %s289 = int_to_ptr.vmem [resolvable:$true] %s288
      %s290 = sshll.u32 %s7, 4
      %s291 = int_to_ptr.hbm [resolvable:$true] %s290
      %293 = dma.vmem_to_hbm [thread:$0]  %s289, 128, %s291, [#allocation4]
    $region57: #{contrastive_clustering_forward.1} parent=1 // pred_fallthru
      _
    // Predicated region
    $region58: #{contrastive_clustering_forward.1} parent=1 // pred_check
      _
    $region59: #{contrastive_clustering_forward.1} parent=1 // pred_check_branch
      %295 = sbr.rel (0) target = $region61
    $region60: #{contrastive_clustering_forward.1} parent=1 // pred_region
      %297 = vsyncadd [#allocation15], 0
      %s299 = sshll.u32 [#allocation14], 4
      %s300 = int_to_ptr.vmem [resolvable:$true] %s299
      %s301 = sshll.u32 %s8, 4
      %s302 = int_to_ptr.hbm [resolvable:$true] %s301
      %304 = dma.vmem_to_hbm [thread:$0]  %s300, 128, %s302, [#allocation15]
    $region61: #{contrastive_clustering_forward.1} parent=1 // pred_fallthru
      _
    // Predicated region
    $region62: #{contrastive_clustering_forward.1} parent=1 // pred_check
      _
    $region63: #{contrastive_clustering_forward.1} parent=1 // pred_check_branch
      %306 = sbr.rel (0) target = $region65
    $region64: #{contrastive_clustering_forward.1} parent=1 // pred_region
      %308 = dma.done [#allocation4], 128
    $region65: #{contrastive_clustering_forward.1} parent=1 // pred_fallthru
      _
    // Predicated region
    $region66: #{contrastive_clustering_forward.1} parent=1 // pred_check
      _
    $region67: #{contrastive_clustering_forward.1} parent=1 // pred_check_branch
      %310 = sbr.rel (0) target = $region69
    $region68: #{contrastive_clustering_forward.1} parent=1 // pred_region
      %312 = dma.done [#allocation15], 128
    $region69: #{contrastive_clustering_forward.1} parent=1 // pred_fallthru
      _
    %313 = vsyncpa [#allocation3], 1
    %314 = vsyncpa [#allocation6], 1
    %315 = vsyncpa [#allocation9], 1
    %316 = vsyncpa [#allocation12], 1
    %317 = vsyncpa [#allocation4], 1
    %318 = vsyncpa [#allocation15], 1

</llo_original>
